<compile_context>
chip_gen: v5e
topology: v5e:2x2
jax: 0.10.0
libtpu: 0.0.40
codegen_flags: <defaults>
</compile_context>

<pallas_src>
import functools

import jax
import jax.numpy as jnp
from jax import lax
from jax.experimental import pallas as pl
from jax.experimental.pallas import tpu as pltpu

_LANE = 128
_MAX_CHUNK = 2048          # max in-kernel compute sub-chunk width (lanes)


def _round_up(x, m):
    return (x + m - 1) // m * m


def _sublane_pad(c, itemsize):
    """Channels rounded up to the VMEM sublane tile (8 rows f32 / 16 rows bf16)."""
    packing = max(1, 4 // itemsize)
    return _round_up(c, 8 * packing)


def _vmem_limit_bytes():
    """Scoped-VMEM limit: generous, but safe on every generation (v7x = 64 MiB)."""
    cap = 64 << 20                       # most restrictive gen: v7x physical VMEM/TC
    try:
        info = pltpu.get_tpu_info()
        cap = int(getattr(info, "vmem_capacity_bytes", cap)) or cap
    except Exception:                    # best-effort query; fall back to v7x-safe cap
        pass
    return max(32 << 20, min(96 << 20, (cap // 4) * 3))   # ~25% headroom


def _choose_tiling(C, HW, x_itemsize, t_itemsize, n_batch, vmem_limit):
    """Pick (tile_hw, chunk, g_hw, ragged).

    tile_hw : lane width of the (1, C, tile_hw) DMA block (BlockSpec tile)
    chunk   : lane width of the in-kernel compute sub-chunk (divides tile_hw)
    g_hw    : number of spatial grid steps
    ragged  : True iff the last tile reads past HW and needs the column mask
    """
    # chunk: bound the f32 compute working set (~5 live (C_pad, chunk) temporaries).
    temps_budget = vmem_limit // 6
    c_pad32 = _round_up(C, 8)
    max_chunk = (temps_budget // (5 * 4 * c_pad32)) // _LANE * _LANE
    chunk = int(max(_LANE, min(_MAX_CHUNK, max_chunk)))

    # tile: bound the double-buffered input DMA blocks (sublane padding included).
    input_budget = vmem_limit // 2
    bytes_per_col = 2 * (_sublane_pad(C, x_itemsize) * x_itemsize
                         + _sublane_pad(C, t_itemsize) * t_itemsize)
    max_cols = int(max(chunk, (input_budget // bytes_per_col) // chunk * chunk))

    # Keep both v7x TensorCores busy when there is no batch parallelism.
    min_g = 2 if (n_batch == 1 and HW >= 2 * _LANE) else 1

    if HW <= chunk and min_g == 1:
        return HW, HW, 1, False          # single full-extent tile, single chunk

    g_hw = max(min_g, pl.cdiv(HW, max_cols))
    tile_hw = _round_up(pl.cdiv(HW, g_hw), _LANE)   # balanced ragged tiles
    chunk = min(chunk, tile_hw)
    tile_hw = _round_up(tile_hw, chunk)             # chunk loop divides evenly
    g_hw = pl.cdiv(HW, tile_hw)
    ragged = (HW % tile_hw) != 0
    return int(tile_hw), int(chunk), int(g_hw), ragged


def _soft_ce_kernel(x_ref, t_ref, out_ref, *, hw, tile_hw, chunk, ignore_value,
                    ragged):
    """One (C, tile_hw) tile -> per-lane partial [loss_sum, count] of width chunk."""
    j = pl.program_id(1)
    num_chunks = tile_hw // chunk

    def accumulate(start, carry):
        acc_loss, acc_cnt = carry
        x = x_ref[:, pl.ds(start, chunk)].astype(jnp.float32)   # (C, chunk)
        t = t_ref[:, pl.ds(start, chunk)].astype(jnp.float32)

        keep = t != ignore_value
        if ragged:
            # Columns past HW hold unspecified (possibly NaN/Inf) data in the
            # last tile: mask them out of both the target and the logits.
            col = lax.broadcasted_iota(jnp.int32, x.shape, 1) + (j * tile_hw + start)
            in_bounds = col < hw
            keep = jnp.logical_and(keep, in_bounds)
            x = jnp.where(in_bounds, x, 0.0)

        # log_softmax over the channel (sublane) axis: -logp = m + lse - x.
        m = jnp.max(x, axis=0, keepdims=True)
        lse = jnp.log(jnp.sum(jnp.exp(x - m), axis=0, keepdims=True))

        t_masked = jnp.where(keep, t, 0.0)           # zero target BEFORE multiplying
        vals = t_masked * ((m + lse) - x)            # masked -logp * target

        acc_loss = acc_loss + jnp.sum(vals, axis=0, keepdims=True)            # (1, chunk)
        acc_cnt = acc_cnt + jnp.sum(keep.astype(jnp.float32), axis=0, keepdims=True)
        return acc_loss, acc_cnt

    init = (jnp.zeros((1, chunk), jnp.float32),
            jnp.zeros((1, chunk), jnp.float32))
    if num_chunks == 1:
        acc_loss, acc_cnt = accumulate(0, init)
    else:
        def body(ci, carry):
            start = pl.multiple_of(ci * chunk, chunk)
            return accumulate(start, carry)
        acc_loss, acc_cnt = lax.fori_loop(0, num_chunks, body, init,
                                          unroll=num_chunks <= 8)

    # Lane-dense partial output: row 0 = per-lane loss sum, row 1 = per-lane count.
    out_ref[0:1, :] = acc_loss
    out_ref[1:2, :] = acc_cnt


def soft_cross_entropy(inputs, target, ignore_index=-1):
    """inputs, target: (N, C, H, W) arrays (f32 or bf16). Returns scalar f32 loss."""
    assert inputs.shape == target.shape
    N, C, H, W = inputs.shape
    HW = H * W

    # Free reshape (collapse contiguous trailing dims); no transpose, no pad copy.
    x = inputs.reshape(N, C, HW)
    t = target.reshape(N, C, HW)

    vmem_limit = _vmem_limit_bytes()
    tile_hw, chunk, g_hw, ragged = _choose_tiling(
        C, HW,
        jnp.dtype(inputs.dtype).itemsize,
        jnp.dtype(target.dtype).itemsize,
        N, vmem_limit)
    n_blocks = N * g_hw

    kernel = functools.partial(
        _soft_ce_kernel,
        hw=HW, tile_hw=tile_hw, chunk=chunk,
        ignore_value=float(ignore_index), ragged=ragged)

    partials = pl.pallas_call(
        kernel,
        out_shape=jax.ShapeDtypeStruct((n_blocks, 2, chunk), jnp.float32),
        grid_spec=pltpu.PrefetchScalarGridSpec(
            num_scalar_prefetch=0,
            grid=(N, g_hw),
            in_specs=[
                pl.BlockSpec((None, C, tile_hw), lambda n, j: (n, 0, j)),
                pl.BlockSpec((None, C, tile_hw), lambda n, j: (n, 0, j)),
            ],
            out_specs=pl.BlockSpec(
                (None, 2, chunk), lambda n, j: (n * g_hw + j, 0, 0)),
        ),
        compiler_params=pltpu.CompilerParams(
            dimension_semantics=("parallel", "parallel"),
            vmem_limit_bytes=vmem_limit,
        ),
    )(x, t)

    loss_sum = jnp.sum(partials[:, 0, :])
    cnt = jnp.sum(partials[:, 1, :])
    # Mean over masked elements (NaN when every element is ignored, as in PyTorch).
    return (loss_sum / cnt).astype(jnp.float32)


def _reference(inputs, target, ignore_index=-1):
    logp = jax.nn.log_softmax(inputs.astype(jnp.float32), axis=1)
    mask = target != ignore_index
    vals = -logp * target.astype(jnp.float32)
    return jnp.sum(jnp.where(mask, vals, 0.0)) / jnp.sum(mask)


if __name__ == "__main__":
    key = jax.random.PRNGKey(0)
    k1, k2, k3 = jax.random.split(key, 3)

    N, C, H, W = 2, 4, 16, 16
    inputs = jax.random.normal(k1, (N, C, H, W), dtype=jnp.float32)

    # target: soft distribution over channels, with some entries set to the
    # ignore_index (-1) to exercise the mask.
    target = jax.nn.softmax(jax.random.normal(k2, (N, C, H, W)), axis=1)
    ignore_mask = jax.random.bernoulli(k3, 0.1, (N, C, H, W))
    target = jnp.where(ignore_mask, jnp.float32(-1.0), target)

    loss = soft_cross_entropy(inputs, target)
    jax.block_until_ready(loss)

    ref = _reference(inputs, target)
    assert jnp.allclose(loss, ref, rtol=1e-5, atol=1e-5), (loss, ref)

    print("KERNEL_OK")
</pallas_src>

<mosaic_0001>
module attributes {stable_mosaic.version = 11 : i64} {
  func.func @_soft_ce_kernel(%arg0: i32, %arg1: i32, %arg2: memref<1x4x256xf32, #tpu.memory_space<vmem>>, %arg3: memref<1x4x256xf32, #tpu.memory_space<vmem>>, %arg4: memref<1x2x256xf32, #tpu.memory_space<vmem>>) attributes {dimension_semantics = [#tpu.dimension_semantics<parallel>, #tpu.dimension_semantics<parallel>], iteration_bounds = array<i64: 2, 1>, scalar_prefetch = 0 : i64, scratch_operands = 0 : i64, tpu.core_type = #tpu.core_type<tc>, window_params = [{transform_indices = @transform_0, window_bounds = array<i64: 1, 4, 256>}, {transform_indices = @transform_1, window_bounds = array<i64: 1, 4, 256>}, {transform_indices = @transform_2, window_bounds = array<i64: 1, 2, 256>}]} {
    %cst = arith.constant 0.000000e+00 : f32
    %0 = vector.broadcast %cst : f32 to vector<1x256xf32>
    %cst_0 = arith.constant 0.000000e+00 : f32
    %1 = vector.broadcast %cst_0 : f32 to vector<1x256xf32>
    %c0 = arith.constant 0 : index
    %c0_1 = arith.constant 0 : index
    %c0_2 = arith.constant 0 : index
    %2 = vector.load %arg2[%c0, %c0_1, %c0_2] : memref<1x4x256xf32, #tpu.memory_space<vmem>>, vector<1x4x256xf32>
    %3 = vector.shape_cast %2 : vector<1x4x256xf32> to vector<4x256xf32>
    %c0_3 = arith.constant 0 : index
    %c0_4 = arith.constant 0 : index
    %c0_5 = arith.constant 0 : index
    %4 = vector.load %arg3[%c0_3, %c0_4, %c0_5] : memref<1x4x256xf32, #tpu.memory_space<vmem>>, vector<1x4x256xf32>
    %5 = vector.shape_cast %4 : vector<1x4x256xf32> to vector<4x256xf32>
    %cst_6 = arith.constant -1.000000e+00 : f32
    %6 = vector.broadcast %cst_6 : f32 to vector<4x256xf32>
    %7 = arith.cmpf one, %5, %6 : vector<4x256xf32>
    %cst_7 = arith.constant dense<0xFF800000> : vector<256xf32>
    %8 = vector.multi_reduction <maximumf>, %3, %cst_7 [0] : vector<4x256xf32> to vector<256xf32>
    %9 = vector.shape_cast %8 : vector<256xf32> to vector<1x256xf32>
    %10 = vector.broadcast %9 : vector<1x256xf32> to vector<4x256xf32>
    %11 = arith.subf %3, %10 : vector<4x256xf32>
    %12 = math.exp %11 : vector<4x256xf32>
    %cst_8 = arith.constant dense<0.000000e+00> : vector<256xf32>
    %13 = vector.multi_reduction <add>, %12, %cst_8 [0] : vector<4x256xf32> to vector<256xf32>
    %14 = vector.shape_cast %13 : vector<256xf32> to vector<1x256xf32>
    %15 = math.log %14 : vector<1x256xf32>
    %cst_9 = arith.constant 0.000000e+00 : f32
    %16 = vector.broadcast %cst_9 : f32 to vector<4x256xf32>
    %17 = arith.select %7, %5, %16 : vector<4x256xi1>, vector<4x256xf32>
    %18 = arith.addf %9, %15 : vector<1x256xf32>
    %19 = vector.broadcast %18 : vector<1x256xf32> to vector<4x256xf32>
    %20 = arith.subf %19, %3 : vector<4x256xf32>
    %21 = arith.mulf %17, %20 : vector<4x256xf32>
    %cst_10 = arith.constant dense<0.000000e+00> : vector<256xf32>
    %22 = vector.multi_reduction <add>, %21, %cst_10 [0] : vector<4x256xf32> to vector<256xf32>
    %23 = vector.shape_cast %22 : vector<256xf32> to vector<1x256xf32>
    %24 = arith.addf %0, %23 : vector<1x256xf32>
    %25 = arith.extui %7 : vector<4x256xi1> to vector<4x256xi32>
    %26 = arith.sitofp %25 : vector<4x256xi32> to vector<4x256xf32>
    %cst_11 = arith.constant dense<0.000000e+00> : vector<256xf32>
    %27 = vector.multi_reduction <add>, %26, %cst_11 [0] : vector<4x256xf32> to vector<256xf32>
    %28 = vector.shape_cast %27 : vector<256xf32> to vector<1x256xf32>
    %29 = arith.addf %1, %28 : vector<1x256xf32>
    %c0_12 = arith.constant 0 : index
    %c0_13 = arith.constant 0 : index
    %c0_14 = arith.constant 0 : index
    %30 = vector.load %arg4[%c0_12, %c0_13, %c0_14] : memref<1x2x256xf32, #tpu.memory_space<vmem>>, vector<1x1x256xf32>
    %31 = vector.shape_cast %30 : vector<1x1x256xf32> to vector<1x256xf32>
    %32 = vector.shape_cast %24 : vector<1x256xf32> to vector<1x1x256xf32>
    tpu.vector_store %arg4[%c0_12, %c0_13, %c0_14], %32 {strides = array<i32>} : memref<1x2x256xf32, #tpu.memory_space<vmem>>, vector<1x1x256xf32>,
    %c0_15 = arith.constant 0 : index
    %c1 = arith.constant 1 : index
    %c0_16 = arith.constant 0 : index
    %33 = vector.load %arg4[%c0_15, %c1, %c0_16] : memref<1x2x256xf32, #tpu.memory_space<vmem>>, vector<1x1x256xf32>
    %34 = vector.shape_cast %33 : vector<1x1x256xf32> to vector<1x256xf32>
    %35 = vector.shape_cast %29 : vector<1x256xf32> to vector<1x1x256xf32>
    tpu.vector_store %arg4[%c0_15, %c1, %c0_16], %35 {strides = array<i32>} : memref<1x2x256xf32, #tpu.memory_space<vmem>>, vector<1x1x256xf32>,
    return
  }
  func.func @transform_0(%arg0: i32, %arg1: i32) -> (i32, i32, i32) {
    %c0_i32 = arith.constant 0 : i32
    %c0_i32_0 = arith.constant 0 : i32
    return %arg0, %c0_i32, %arg1 : i32, i32, i32
  }
  func.func @transform_1(%arg0: i32, %arg1: i32) -> (i32, i32, i32) {
    %c0_i32 = arith.constant 0 : i32
    %c0_i32_0 = arith.constant 0 : i32
    return %arg0, %c0_i32, %arg1 : i32, i32, i32
  }
  func.func @transform_2(%arg0: i32, %arg1: i32) -> (i32, i32, i32) {
    %c1_i32 = arith.constant 1 : i32
    %0 = arith.muli %arg0, %c1_i32 : i32
    %1 = arith.addi %0, %arg1 : i32
    %c0_i32 = arith.constant 0 : i32
    %c0_i32_0 = arith.constant 0 : i32
    %c0_i32_1 = arith.constant 0 : i32
    return %1, %c0_i32, %c0_i32_0 : i32, i32, i32
  }
}

</mosaic_0001>

<llo_original>
// kernel: tpu_custom_call.1
$region0: #{tpu_custom_call.1}
  #allocation0 [shape = 'u32[]', space=smem, size = 0x4, offset = 0x4, fixed_abs, tag = 'smem constant byte address 0x4 - core index']
  #allocation1 [shape = 'u32[72,128]{1,0:T(1,128)}', space=vmem, size = 0x9000, scoped, tag = 'internal scratch']
  %s0 = inlined_call_operand.hbm [shape: f32[2,4,256], index: 0, kind: input, shape index: {}]
  %s1 = inlined_call_operand.hbm [shape: f32[2,4,256], index: 1, kind: input, shape index: {}]
  %s2 = inlined_call_operand.hbm [shape: f32[2,2,256], index: 2, kind: output, shape index: {}]
  %s3 = sld [smem:[#allocation0]]
  $region49: #{tpu_custom_call.1} parent=0
    _
  %s5 = ssub.s32 1, %s3
  %s6 = scalar_select 0, %s5, %s3
  $region1: #{tpu_custom_call.1} parent=0
    #allocation2 [shape = 'u8[8192]{0}', space=vmem, size = 0x2000, scoped, tag = 'input window, operand 0']
    #allocation3 [shape = 's32[2]{0}', space=sflag, size = 0x8, scoped, tag = 'scoped memory for tpu_custom_call.1']
    #allocation4 [shape = 's32[2]{0}', space=sflag, size = 0x8, scoped, tag = 'scoped memory for tpu_custom_call.1']
    #allocation5 [shape = 'u8[8192]{0}', space=vmem, size = 0x2000, scoped, tag = 'input window, operand 1']
    #allocation6 [shape = 's32[2]{0}', space=sflag, size = 0x8, scoped, tag = 'scoped memory for tpu_custom_call.1']
    #allocation7 [shape = 'u8[4096]{0}', space=vmem, size = 0x1000, scoped, tag = 'output window, operand 0']
    %7 = vsyncpa [#allocation3], 0
    %s8 = scalar_lea.sflag [#allocation3], 1
    %9 = vsyncpa %s8, 0
    %10 = vsyncpa [#allocation6], 0
    %s11 = scalar_lea.sflag [#allocation6], 1
    %12 = vsyncpa %s11, 0
    %13 = vsyncpa [#allocation4], 0
    %s14 = scalar_lea.sflag [#allocation4], 1
    %15 = vsyncpa %s14, 0
    loop: start=0, step=1, limit=4
    $region2: #{tpu_custom_call.1} parent=1 // loop_pre_header
      _
    $region3: #{tpu_custom_call.1} parent=1 // loop_header
      %s17 = sphi 0, %s21
      %p18 = scmp.ge.s32.totalorder %s17, 4
      %s24 = sphi 0, %s36
      %s25 = sphi 0, %s32
      %s26 = sphi 0, %s24
      %s27 = sphi 0, %s25
      %s28 = sphi 0, %s26
      %s29 = sphi 0, %s27
      %s41 = sphi 0, %s43
      %s44 = sphi 0, %s41
      %s45 = sphi 0, %s44
      %s61 = sphi 0, %s45
      %s69 = sphi 0, %s71
      %s72 = sphi 0, %s69
      %s73 = sphi 0, %s72
      %s89 = sphi 0, %s73
      %s97 = sphi 0, %s99
      %s100 = sphi 0, %s97
      %s101 = sphi 0, %s100
      %s117 = sphi 0, %s101
    $region4: #{tpu_custom_call.1} parent=1 // loop_header_branch
      %20 = sbr.rel (%p18) target = $region8
    $region5: #{tpu_custom_call.1} parent=1 // loop_body
      %s22 = ssub.s32 %s17, 1
      %s23 = ssub.s32 %s17, 2
      %s30 = sadd.s32 1, %s25
      %p31 = scmp.ge.s32.totalorder %s30, 1
      %s32 = scalar_select %p31, 0, %s30
      %s33 = sadd.s32 1, %s24
      %s34 = scalar_select %p31, %s33, %s24
      %p35 = scmp.ge.s32.totalorder %s34, 2
      %s36 = scalar_select %p35, 0, %s34
      %s37 = ssub.s32 %s24, %s36
      %s38 = ssub.s32 %s25, %s32
      %s39 = sor.u32 %s37, %s38
      %p40 = scmp.eq.s32.totalorder %s39, 0
      %s42 = sadd.s32 %s41, 1
      %s43 = scalar_select %p40, %s41, %s42
      %p46 = pneg %p40
      %p47 = scmp.eq.s32.totalorder %s17, 1
      %p48 = por %p46, %p47
      %p49 = scmp.ne.s32.totalorder %s41, %s44
      %p50 = scmp.eq.s32.totalorder %s17, 0
      %p51 = por %p49, %p50
      %p52 = scmp.ne.s32.totalorder %s41, %s44
      %p53 = scmp.eq.s32.totalorder %s22, 1
      %p54 = por %p52, %p53
      %p55 = scmp.ne.s32.totalorder %s44, %s45
      %p56 = scmp.eq.s32.totalorder %s22, 0
      %p57 = por %p55, %p56
      %p58 = scmp.ne.s32.totalorder %s44, %s45
      %p59 = scmp.eq.s32.totalorder %s23, 1
      %p60 = por %p58, %p59
      %p62 = scmp.ne.s32.totalorder %s45, %s61
      %p63 = scmp.eq.s32.totalorder %s23, 0
      %p64 = por %p62, %p63
      %s65 = ssub.s32 %s24, %s36
      %s66 = ssub.s32 %s25, %s32
      %s67 = sor.u32 %s65, %s66
      %p68 = scmp.eq.s32.totalorder %s67, 0
      %s70 = sadd.s32 %s69, 1
      %s71 = scalar_select %p68, %s69, %s70
      %p74 = pneg %p68
      %p75 = scmp.eq.s32.totalorder %s17, 1
      %p76 = por %p74, %p75
      %p77 = scmp.ne.s32.totalorder %s69, %s72
      %p78 = scmp.eq.s32.totalorder %s17, 0
      %p79 = por %p77, %p78
      %p80 = scmp.ne.s32.totalorder %s69, %s72
      %p81 = scmp.eq.s32.totalorder %s22, 1
      %p82 = por %p80, %p81
      %p83 = scmp.ne.s32.totalorder %s72, %s73
      %p84 = scmp.eq.s32.totalorder %s22, 0
      %p85 = por %p83, %p84
      %p86 = scmp.ne.s32.totalorder %s72, %s73
      %p87 = scmp.eq.s32.totalorder %s23, 1
      %p88 = por %p86, %p87
      %p90 = scmp.ne.s32.totalorder %s73, %s89
      %p91 = scmp.eq.s32.totalorder %s23, 0
      %p92 = por %p90, %p91
      %s93 = sadd.s32 %s24, %s25
      %s94 = sadd.s32 %s36, %s32
      %s95 = ssub.s32 %s93, %s94
      %p96 = scmp.eq.s32.totalorder %s95, 0
      %s98 = sadd.s32 %s97, 1
      %s99 = scalar_select %p96, %s97, %s98
      %p102 = pneg %p96
      %p103 = scmp.eq.s32.totalorder %s17, 1
      %p104 = por %p102, %p103
      %p105 = scmp.ne.s32.totalorder %s97, %s100
      %p106 = scmp.eq.s32.totalorder %s17, 0
      %p107 = por %p105, %p106
      %p108 = scmp.ne.s32.totalorder %s97, %s100
      %p109 = scmp.eq.s32.totalorder %s22, 1
      %p110 = por %p108, %p109
      %p111 = scmp.ne.s32.totalorder %s100, %s101
      %p112 = scmp.eq.s32.totalorder %s22, 0
      %p113 = por %p111, %p112
      %p114 = scmp.ne.s32.totalorder %s100, %s101
      %p115 = scmp.eq.s32.totalorder %s23, 1
      %p116 = por %p114, %p115
      %p118 = scmp.ne.s32.totalorder %s101, %s117
      %p119 = scmp.eq.s32.totalorder %s23, 0
      %p120 = por %p118, %p119
      %p121 = scmp.le.s32.totalorder 1, %s17
      %p122 = scmp.lt.s32.totalorder %s17, 3
      %p123 = pnand %p121, %p122
      %p124 = pneg %p123
      // Predicated region
      $region9: #{tpu_custom_call.1} parent=5 // pred_check
        _
      $region10: #{tpu_custom_call.1} parent=5 // pred_check_branch
        %126 = sbr.rel (%p123) target = $region12
      $region11: #{tpu_custom_call.1} parent=5 // pred_region
        %s127 = ssub.s32 %s17, 1
      $region12: #{tpu_custom_call.1} parent=5 // pred_fallthru
        _
      %p128 = scmp.lt.s32.totalorder %s17, 2
      // Predicated region
      $region13: #{tpu_custom_call.1} parent=5 // pred_check
        %p129 = pneg %p128
      $region14: #{tpu_custom_call.1} parent=5 // pred_check_branch
        %131 = sbr.rel (%p129) target = $region16
      $region15: #{tpu_custom_call.1} parent=5 // pred_region
        // Predicated region
        $region17: #{tpu_custom_call.1} parent=15 // pred_check
          %p132 = pneg %p51
        $region18: #{tpu_custom_call.1} parent=15 // pred_check_branch
          %134 = sbr.rel (%p132) target = $region20
        $region19: #{tpu_custom_call.1} parent=15 // pred_region
          %s135 = sand.u32 %s41, 1
          %s136 = scalar_lea.sflag [#allocation3], %s135
          %s137 = sand.u32 %s41, 1
          %s138 = smul.addr %s137, 8
          %s139 = scalar_lea.vmem [#allocation2], %s138
          %s140 = smul.u32 2, %s25
          %142 = vsyncadd %s136, 0
          %s143 = smul.addr %s24, 2
          %s144 = sadd.s32 %s140, %s143
          %s145 = smul.addr %s144, 4
          %s146 = scalar_lea.hbm %s0, %s145
          %s148 = sshll.u32 %s146, 4
          %s149 = int_to_ptr.hbm [resolvable:$true] %s148
          %s150 = sshll.u32 %s139, 4
          %s151 = int_to_ptr.vmem [resolvable:$true] %s150
          %153 = dma.hbm_to_vmem [thread:$0]  %s149, 128, %s151, %s136
        $region20: #{tpu_custom_call.1} parent=15 // pred_fallthru
          _
        // Predicated region
        $region21: #{tpu_custom_call.1} parent=15 // pred_check
          %p154 = pneg %p79
        $region22: #{tpu_custom_call.1} parent=15 // pred_check_branch
          %156 = sbr.rel (%p154) target = $region24
        $region23: #{tpu_custom_call.1} parent=15 // pred_region
          %s157 = sand.u32 %s69, 1
          %s158 = scalar_lea.sflag [#allocation6], %s157
          %s159 = sand.u32 %s69, 1
          %s160 = smul.addr %s159, 8
          %s161 = scalar_lea.vmem [#allocation5], %s160
          %s162 = smul.u32 2, %s25
          %164 = vsyncadd %s158, 0
          %s165 = smul.addr %s24, 2
          %s166 = sadd.s32 %s162, %s165
          %s167 = smul.addr %s166, 4
          %s168 = scalar_lea.hbm %s1, %s167
          %s170 = sshll.u32 %s168, 4
          %s171 = int_to_ptr.hbm [resolvable:$true] %s170
          %s172 = sshll.u32 %s161, 4
          %s173 = int_to_ptr.vmem [resolvable:$true] %s172
          %175 = dma.hbm_to_vmem [thread:$0]  %s171, 128, %s173, %s158
        $region24: #{tpu_custom_call.1} parent=15 // pred_fallthru
          _
      $region16: #{tpu_custom_call.1} parent=5 // pred_fallthru
        _
      %p176 = scmp.le.s32.totalorder 1, %s17
      %p177 = scmp.lt.s32.totalorder %s17, 3
      %p178 = pnand %p176, %p177
      %p179 = pneg %p178
      // Predicated region
      $region25: #{tpu_custom_call.1} parent=5 // pred_check
        _
      $region26: #{tpu_custom_call.1} parent=5 // pred_check_branch
        %181 = sbr.rel (%p178) target = $region28
      $region27: #{tpu_custom_call.1} parent=5 // pred_region
        %s182 = ssub.s32 %s17, 1
        %s183 = sand.u32 %s44, 1
        %s184 = scalar_lea.sflag [#allocation3], %s183
        %s185 = sand.u32 %s44, 1
        %s186 = smul.addr %s185, 8
        %s187 = scalar_lea.vmem [#allocation2], %s186
        // Predicated region
        $region29: #{tpu_custom_call.1} parent=27 // pred_check
          %p188 = pneg %p57
        $region30: #{tpu_custom_call.1} parent=27 // pred_check_branch
          %190 = sbr.rel (%p188) target = $region32
        $region31: #{tpu_custom_call.1} parent=27 // pred_region
          %192 = dma.done %s184, 128
        $region32: #{tpu_custom_call.1} parent=27 // pred_fallthru
          _
        %s193 = sand.u32 %s72, 1
        %s194 = scalar_lea.sflag [#allocation6], %s193
        %s195 = sand.u32 %s72, 1
        %s196 = smul.addr %s195, 8
        %s197 = scalar_lea.vmem [#allocation5], %s196
        // Predicated region
        $region33: #{tpu_custom_call.1} parent=27 // pred_check
          %p198 = pneg %p85
        $region34: #{tpu_custom_call.1} parent=27 // pred_check_branch
          %200 = sbr.rel (%p198) target = $region36
        $region35: #{tpu_custom_call.1} parent=27 // pred_region
          %202 = dma.done %s194, 128
        $region36: #{tpu_custom_call.1} parent=27 // pred_fallthru
          _
        %s203 = sand.u32 %s44, 1
        %s204 = scalar_lea.sflag [#allocation3], %s203
        %s205 = sand.u32 %s44, 1
        %s206 = smul.addr %s205, 8
        %s207 = scalar_lea.vmem [#allocation2], %s206
        %p208 = pneg %p57
        %p209 = pneg %p54
        %s210 = sand.u32 %s72, 1
        %s211 = scalar_lea.sflag [#allocation6], %s210
        %s212 = sand.u32 %s72, 1
        %s213 = smul.addr %s212, 8
        %s214 = scalar_lea.vmem [#allocation5], %s213
        %p215 = pneg %p85
        %p216 = pneg %p82
        %p217 = pneg %p113
        %p218 = pneg %p110
        %s219 = sand.u32 %s100, 1
        %s220 = scalar_lea.sflag [#allocation4], %s219
        %s221 = sand.u32 %s100, 1
        %s222 = smul.addr %s221, 4
        %s223 = scalar_lea.vmem [#allocation7], %s222
        %s224 = smul.u32 2, %s27
        %s225 = smul.u32 2, %s27
        %s226 = sadd.s32 %s26, %s27
        %v227 = vld [vmem:[%s187] sm:$0xff]
        %v228 = vld [vmem:[%s197] sm:$0xff]
        %vm229 = vcmp.ne.f32.partialorder %v228, -1.0
        %231 = vst [vmem:[#allocation1] ss:$2 sm:$0xff] %v227
        %v232 = vld.sshfl [vmem:[#allocation1] sm:$0xff pattern:$0x75316420]
        %v233 = vld.sshfl [vmem:[#allocation1 + $0x8] sm:$0xff pattern:$0x75316420]
        %vm236 = vcmask 1043456
        %v237 = vsel %vm236, %v232, -inf
        %v238 = vrot.slane %v237, 4
        %v239 = vmax.f32 %v237, %v238
        %v240 = vrot.slane %v239, 2
        %v241 = vmax.f32 %v239, %v240
        %v242 = vrot.slane %v241, 1
        %v243 = vmax.f32 %v241, %v242
        %v244 = vsel %vm236, %v233, -inf
        %v245 = vrot.slane %v244, 4
        %v246 = vmax.f32 %v244, %v245
        %v247 = vrot.slane %v246, 2
        %v248 = vmax.f32 %v246, %v247
        %v249 = vrot.slane %v248, 1
        %v250 = vmax.f32 %v248, %v249
        %v253 = vrot.slane %v250, 4
        %v254 = vsel %vm236, %v243, %v253
        %v256 = vsub.f32 %v227, %v254
        %v257 = vmul.f32 %v256, 1.442695
        %v258 = vpow.pop %v257
        %260 = vst [vmem:[#allocation1] ss:$2 sm:$0xff] %v258
        %v261 = vld.sshfl [vmem:[#allocation1] sm:$0xff pattern:$0x75316420]
        %v262 = vld.sshfl [vmem:[#allocation1 + $0x8] sm:$0xff pattern:$0x75316420]
        %v265 = vsel %vm236, %v261, 0.0
        %v266 = vrot.slane %v265, 4
        %v267 = vadd.f32 %v265, %v266
        %v268 = vrot.slane %v267, 2
        %v269 = vadd.f32 %v267, %v268
        %v270 = vrot.slane %v269, 1
        %v271 = vadd.f32 %v269, %v270
        %v272 = vsel %vm236, %v262, 0.0
        %v273 = vrot.slane %v272, 4
        %v274 = vadd.f32 %v272, %v273
        %v275 = vrot.slane %v274, 2
        %v276 = vadd.f32 %v274, %v275
        %v277 = vrot.slane %v276, 1
        %v278 = vadd.f32 %v276, %v277
        %v279 = vlog2.pop %v271
        %v280 = vmul.f32 %v279, 0.6931472
        %v281 = vlog2.pop %v278
        %v282 = vmul.f32 %v281, 0.6931472
        %v283 = vsel %vm229, %v228, 0.0
        %v284 = vadd.f32 %v243, %v280
        %v285 = vadd.f32 %v250, %v282
        %286 = vst [vmem:[#allocation1] ss:$2 sm:$0xff] %v227
        %v287 = vld.sshfl [vmem:[#allocation1] sm:$0xff pattern:$0x75316420]
        %v288 = vld.sshfl [vmem:[#allocation1 + $0x8] sm:$0xff pattern:$0x75316420]
        %v291 = vsub.f32 %v284, %v287
        %v292 = vsub.f32 %v285, %v288
        %v295 = vrot.slane %v292, 4
        %v296 = vsel %vm236, %v291, %v295
        %v298 = vmul.f32 %v283, %v296
        %300 = vst [vmem:[#allocation1] ss:$2 sm:$0xff] %v298
        %v301 = vld.sshfl [vmem:[#allocation1] sm:$0xff pattern:$0x75316420]
        %v302 = vld.sshfl [vmem:[#allocation1 + $0x8] sm:$0xff pattern:$0x75316420]
        %v305 = vsel %vm236, %v301, 0.0
        %v306 = vrot.slane %v305, 4
        %v307 = vadd.f32 %v305, %v306
        %v308 = vrot.slane %v307, 2
        %v309 = vadd.f32 %v307, %v308
        %v310 = vrot.slane %v309, 1
        %v311 = vadd.f32 %v309, %v310
        %v312 = vsel %vm236, %v302, 0.0
        %v313 = vrot.slane %v312, 4
        %v314 = vadd.f32 %v312, %v313
        %v315 = vrot.slane %v314, 2
        %v316 = vadd.f32 %v314, %v315
        %v317 = vrot.slane %v316, 1
        %v318 = vadd.f32 %v316, %v317
        %v319 = vadd.f32 %v311, 0.0
        %v320 = vadd.f32 %v318, 0.0
        %v321 = vsel %vm229, 1, 0
        %v322 = vcvt.s32.f32 %v321
        %324 = vst [vmem:[#allocation1] ss:$2 sm:$0xff] %v322
        %v325 = vld.sshfl [vmem:[#allocation1] sm:$0xff pattern:$0x75316420]
        %v326 = vld.sshfl [vmem:[#allocation1 + $0x8] sm:$0xff pattern:$0x75316420]
        %v329 = vsel %vm236, %v325, 0.0
        %v330 = vrot.slane %v329, 4
        %v331 = vadd.f32 %v329, %v330
        %v332 = vrot.slane %v331, 2
        %v333 = vadd.f32 %v331, %v332
        %v334 = vrot.slane %v333, 1
        %v335 = vadd.f32 %v333, %v334
        %v336 = vsel %vm236, %v326, 0.0
        %v337 = vrot.slane %v336, 4
        %v338 = vadd.f32 %v336, %v337
        %v339 = vrot.slane %v338, 2
        %v340 = vadd.f32 %v338, %v339
        %v341 = vrot.slane %v340, 1
        %v342 = vadd.f32 %v340, %v341
        %v343 = vadd.f32 %v335, 0.0
        %v344 = vadd.f32 %v342, 0.0
        %v347 = vrot.slane %v320, 7
        %vm348 = vcmask 1040384
        %v349 = vsel %vm348, %v319, %v347
        %v351 = vlaneseq
        %vm352 = vcmp.ge.s32.totalorder %v351, 0
        %vm353 = vcmp.lt.s32.totalorder %v351, 256
        %vm354 = vmand %vm352, %vm353
        %355 = vst.msk [vmem:[%s223] ss:$2 sm:$0x3] %vm354, %v349
        %v358 = vrot.slane %v344, 7
        %v359 = vsel %vm348, %v343, %v358
        %s361 = scalar_lea.vmem %s223, 1 [#allocation7]
        %362 = vst.msk [vmem:[%s361] ss:$2 sm:$0x3] %vm354, %v359
        %s363 = sand.u32 %s100, 1
        %s364 = scalar_lea.sflag [#allocation4], %s363
        %s365 = sand.u32 %s100, 1
        %s366 = smul.addr %s365, 4
        %s367 = scalar_lea.vmem [#allocation7], %s366
        // Predicated region
        $region37: #{tpu_custom_call.1} parent=27 // pred_check
          %p368 = pneg %p110
        $region38: #{tpu_custom_call.1} parent=27 // pred_check_branch
          %370 = sbr.rel (%p368) target = $region40
        $region39: #{tpu_custom_call.1} parent=27 // pred_region
          %s371 = sadd.s32 %s26, %s27
          %373 = vsyncadd %s364, 0
          %s374 = smul.addr %s371, 2
          %s375 = smul.addr %s374, 2
          %s376 = scalar_lea.hbm %s2, %s375
          %s378 = sshll.u32 %s367, 4
          %s379 = int_to_ptr.vmem [resolvable:$true] %s378
          %s380 = sshll.u32 %s376, 4
          %s381 = int_to_ptr.hbm [resolvable:$true] %s380
          %383 = dma.vmem_to_hbm [thread:$0]  %s379, 64, %s381, %s364
        $region40: #{tpu_custom_call.1} parent=27 // pred_fallthru
          _
      $region28: #{tpu_custom_call.1} parent=5 // pred_fallthru
        _
      %p384 = scmp.le.s32.totalorder 2, %s17
      // Predicated region
      $region41: #{tpu_custom_call.1} parent=5 // pred_check
        %p385 = pneg %p384
      $region42: #{tpu_custom_call.1} parent=5 // pred_check_branch
        %387 = sbr.rel (%p385) target = $region44
      $region43: #{tpu_custom_call.1} parent=5 // pred_region
        %s388 = ssub.s32 %s17, 2
        // Predicated region
        $region45: #{tpu_custom_call.1} parent=43 // pred_check
          %p389 = pneg %p116
        $region46: #{tpu_custom_call.1} parent=43 // pred_check_branch
          %391 = sbr.rel (%p389) target = $region48
        $region47: #{tpu_custom_call.1} parent=43 // pred_region
          %s392 = sand.u32 %s101, 1
          %s393 = scalar_lea.sflag [#allocation4], %s392
          %s394 = sand.u32 %s101, 1
          %s395 = smul.addr %s394, 4
          %s396 = scalar_lea.vmem [#allocation7], %s395
          %398 = dma.done %s393, 64
        $region48: #{tpu_custom_call.1} parent=43 // pred_fallthru
          _
      $region44: #{tpu_custom_call.1} parent=5 // pred_fallthru
        _
    $region6: #{tpu_custom_call.1} parent=1 // loop_footer
      %s21 = sadd.s32 1, %s17
    $region7: #{tpu_custom_call.1} parent=1 // loop_footer_branch
      %16 = sbr.rel target = $region3
    $region8: #{tpu_custom_call.1} parent=1 // loop_exit
      _
    %399 = vsyncpa [#allocation3], 1
    %s400 = scalar_lea.sflag [#allocation3], 1
    %401 = vsyncpa %s400, 1
    %402 = vsyncpa [#allocation6], 1
    %s403 = scalar_lea.sflag [#allocation6], 1
    %404 = vsyncpa %s403, 1
    %405 = vsyncpa [#allocation4], 1
    %s406 = scalar_lea.sflag [#allocation4], 1
    %407 = vsyncpa %s406, 1

</llo_original>
